<compile_context>
chip_gen: v6e
topology: v6e:2x2x1
jax: 0.10.0
libtpu: 0.0.40
codegen_flags: <defaults>
</compile_context>

<pallas_src>
import math

import jax
import jax.numpy as jnp
from jax import lax
from jax.experimental import pallas as pl
from jax.experimental.pallas import tpu as pltpu


# -----------------------------------------------------------------------------
# VMEM budgeting / feature detection helpers
# -----------------------------------------------------------------------------
def _vmem_limit_bytes():
    """Scoped-VMEM limit: 3/4 of physical capacity (64 MiB fallback is safe on
    every generation: v5e/v6e have 128 MiB, v7x has 64 MiB)."""
    cap = 64 * 1024 * 1024
    try:
        info = pltpu.get_tpu_info()
        for name in ("vmem_capacity_bytes", "vmem_size_bytes", "vmem_bytes"):
            v = getattr(info, name, None)
            if v:
                cap = int(v)
                break
    except Exception:
        pass
    return int(cap * 3 // 4)


_BUFFERED1_OK = None


def _single_buffered_supported():
    """Feature-test pipeline_mode=pl.Buffered(1) with a tiny kernel (compile +
    run + numerics check). Falls back gracefully if unsupported."""
    global _BUFFERED1_OK
    if _BUFFERED1_OK is not None:
        return _BUFFERED1_OK
    try:
        def k(x_ref, o_ref):
            o_ref[...] = x_ref[...] + 1.0

        f = pl.pallas_call(
            k,
            out_shape=jax.ShapeDtypeStruct((16, 128), jnp.float32),
            grid=(2,),
            in_specs=[pl.BlockSpec((8, 128), lambda i: (0, 0),
                                   pipeline_mode=pl.Buffered(1))],
            out_specs=pl.BlockSpec((8, 128), lambda i: (i, 0)),
        )
        x = jnp.arange(8 * 128, dtype=jnp.float32).reshape(8, 128)
        y = jax.block_until_ready(f(x))
        expect = jnp.concatenate([x + 1.0, x + 1.0], axis=0)
        _BUFFERED1_OK = bool(jnp.allclose(y, expect))
    except Exception:
        _BUFFERED1_OK = False
    return _BUFFERED1_OK


def _const_spec(block_shape, index_map):
    """BlockSpec for a grid-invariant operand (weight / bias): single-buffered
    if supported, otherwise default."""
    if _single_buffered_supported():
        return pl.BlockSpec(block_shape, index_map, pipeline_mode=pl.Buffered(1))
    return pl.BlockSpec(block_shape, index_map)


# -----------------------------------------------------------------------------
# Kernel 1 family: row-tiled projections / FC (hoisted, time-parallel MXU work)
# -----------------------------------------------------------------------------
def _proj_in_kernel(x_ref, w_ref, b_ref, gf_ref, gb_ref):
    # x:(tn,D) bf16, w:(D,8H) bf16, b:(1,8H) f32 -> gf/gb:(tn,4H) bf16
    G = gf_ref.shape[-1]
    g = jnp.dot(x_ref[...], w_ref[...],
                preferred_element_type=jnp.float32) + b_ref[...]
    gf_ref[...] = g[:, :G].astype(gf_ref.dtype)
    gb_ref[...] = g[:, G:].astype(gb_ref.dtype)


def _proj_hidden_kernel(hf_ref, hb_ref, wt_ref, wb_ref, b_ref, gf_ref, gb_ref):
    # [hf|hb] @ W_ih done as hf@W_top + hb@W_bot -> no (T,B,2H) concat in HBM.
    G = gf_ref.shape[-1]
    g = (jnp.dot(hf_ref[...], wt_ref[...], preferred_element_type=jnp.float32)
         + jnp.dot(hb_ref[...], wb_ref[...], preferred_element_type=jnp.float32)
         + b_ref[...])
    gf_ref[...] = g[:, :G].astype(gf_ref.dtype)
    gb_ref[...] = g[:, G:].astype(gb_ref.dtype)


def _fc_sigmoid_kernel(hf_ref, hb_ref, wt_ref, wb_ref, b_ref, o_ref):
    y = (jnp.dot(hf_ref[...], wt_ref[...], preferred_element_type=jnp.float32)
         + jnp.dot(hb_ref[...], wb_ref[...], preferred_element_type=jnp.float32)
         + b_ref[...])
    o_ref[...] = jax.nn.sigmoid(y).astype(o_ref.dtype)


def _row_tiled(kernel, row_ins, const_ins, outs, budget, vmem_limit):
    """Generic row-tiled matmul-style pallas_call.

    row_ins:  list of (N, Ki) arrays, blocked over rows.
    const_ins: small grid-invariant operands (weights/biases), kept resident.
    outs:     list of (width, dtype) for (N, width) outputs.
    The row tile tn is derived from a VMEM byte budget; rows are padded to a
    multiple of tn so the pipeline always has >1 step when profitable.
    """
    N = row_ins[0].shape[0]
    row_bytes = sum(2 * a.shape[1] * a.dtype.itemsize for a in row_ins)
    row_bytes += sum(2 * w * jnp.dtype(dt).itemsize for w, dt in outs)
    resident = sum(2 * int(a.size) * a.dtype.itemsize for a in const_ins)

    tn = (budget - resident) // max(row_bytes, 1)
    tn = int(max(16, min(tn, 1024)))
    tn -= tn % 16                                   # bf16-friendly sublane count
    tn = min(tn, ((N + 15) // 16) * 16)
    Np = ((N + tn - 1) // tn) * tn
    if Np != N:
        row_ins = [jnp.pad(a, ((0, Np - N), (0, 0))) for a in row_ins]

    in_specs = [pl.BlockSpec((tn, a.shape[1]), lambda i: (i, 0)) for a in row_ins]
    in_specs += [_const_spec(c.shape, lambda i: (0, 0)) for c in const_ins]
    out_specs = [pl.BlockSpec((tn, w), lambda i: (i, 0)) for w, _ in outs]
    out_shape = tuple(jax.ShapeDtypeStruct((Np, w), dt) for w, dt in outs)

    res = pl.pallas_call(
        kernel,
        out_shape=out_shape,
        grid_spec=pltpu.PrefetchScalarGridSpec(
            num_scalar_prefetch=0,
            grid=(Np // tn,),
            in_specs=in_specs,
            out_specs=out_specs,
        ),
        compiler_params=pltpu.CompilerParams(
            dimension_semantics=("parallel",),
            vmem_limit_bytes=vmem_limit),
    )(*row_ins, *const_ins)
    if not isinstance(res, (tuple, list)):
        res = (res,)
    return tuple(r[:N] if Np != N else r for r in res)


# -----------------------------------------------------------------------------
# Kernel 2: fused forward+backward LSTM recurrence, chunked over time
# -----------------------------------------------------------------------------
def _bilstm_layer_kernel(gxf_ref, gxb_ref, whh_ref, outf_ref, outb_ref,
                         h_sc, cf_sc, cb_sc):
    # gxf_ref: (Tc,B,4H) bf16 gate pre-acts for fwd times of chunk c
    # gxb_ref: (Tc,B,4H) bf16 gate pre-acts of chunk C-1-c (time-ascending order)
    # whh_ref: (2H,8H) bf16 block-diagonal [[Whh_f,0],[0,Whh_b]] (gates i,f,o,g)
    @pl.when(pl.program_id(0) == 0)
    def _():
        h_sc[...] = jnp.zeros_like(h_sc)
        cf_sc[...] = jnp.zeros_like(cf_sc)
        cb_sc[...] = jnp.zeros_like(cb_sc)

    H = cf_sc.shape[-1]
    Tc = gxf_ref.shape[0]
    w = whh_ref[...]                         # hoisted: resident across the chunk

    # Carry state in registers; scratch touched once per chunk.
    h = h_sc[...]                            # (B, 2H) f32 = [hf | hb]
    cf = cf_sc[...]
    cb = cb_sc[...]

    def cell(pre, c_prev):
        # gate order (i, f, o, g): one EUP sigmoid over 3H, one tanh over H.
        s = jax.nn.sigmoid(pre[:, :3 * H])
        g = jnp.tanh(pre[:, 3 * H:])
        c_new = s[:, H:2 * H] * c_prev + s[:, :H] * g
        h_new = s[:, 2 * H:3 * H] * jnp.tanh(c_new)
        return h_new, c_new

    for i in range(Tc):                      # fully unrolled static chunk
        j = Tc - 1 - i
        # ONE fused MXU op for both directions per step.
        rec = jnp.dot(h.astype(w.dtype), w, preferred_element_type=jnp.float32)
        pf = gxf_ref[i].astype(jnp.float32) + rec[:, :4 * H]
        pb = gxb_ref[j].astype(jnp.float32) + rec[:, 4 * H:]
        hf, cf = cell(pf, cf)
        hb, cb = cell(pb, cb)
        outf_ref[i] = hf.astype(outf_ref.dtype)
        outb_ref[j] = hb.astype(outb_ref.dtype)
        h = jnp.concatenate([hf, hb], axis=-1)

    h_sc[...] = h
    cf_sc[...] = cf
    cb_sc[...] = cb


def _choose_time_chunk(T, cap):
    """Largest divisor of T in (cap/2, cap]; otherwise pad T up to cap-multiple."""
    cap = max(1, min(cap, T))
    for tc in range(cap, max(cap // 2, 1) - 1, -1):
        if T % tc == 0:
            return tc, T
    Tp = ((T + cap - 1) // cap) * cap
    return cap, Tp


def bilstm_layer(gx_f, gx_b, w_hh_blk, budget, vmem_limit):
    """gx_*: (T, Bp, 4H) bf16; w_hh_blk: (2H, 8H) bf16 -> (h_f, h_b) (T,Bp,H) bf16."""
    T, Bp, G = gx_f.shape
    H = G // 4

    # VMEM budget per time step in a chunk: gx in (2 dirs x 2 bufs) + h out.
    per_step = 2 * 2 * Bp * G * 2 + 2 * 2 * Bp * H * 2
    resident = 2 * int(w_hh_blk.size) * 2 + 4 * Bp * H * 4
    cap = max(1, (budget - resident) // max(per_step, 1))
    cap = int(min(cap, 32, T))               # 32 caps unroll / compile time
    Tc, Tp = _choose_time_chunk(T, cap)
    if Tp != T:
        # Pad gate pre-acts with a large negative constant: i/f/o gates ~= 0 so
        # the state stays ~0 through pad steps (backward chain starts in pad).
        pad = ((0, Tp - T), (0, 0), (0, 0))
        gx_f = jnp.pad(gx_f, pad, constant_values=-30.0)
        gx_b = jnp.pad(gx_b, pad, constant_values=-30.0)
    C = Tp // Tc

    h_f, h_b = pl.pallas_call(
        _bilstm_layer_kernel,
        out_shape=(jax.ShapeDtypeStruct((Tp, Bp, H), jnp.bfloat16),
                   jax.ShapeDtypeStruct((Tp, Bp, H), jnp.bfloat16)),
        grid_spec=pltpu.PrefetchScalarGridSpec(
            num_scalar_prefetch=0,
            grid=(C,),
            in_specs=[
                pl.BlockSpec((Tc, Bp, G), lambda c: (c, 0, 0)),
                pl.BlockSpec((Tc, Bp, G), lambda c: (C - 1 - c, 0, 0)),
                _const_spec((2 * H, 2 * G), lambda c: (0, 0)),
            ],
            out_specs=[
                pl.BlockSpec((Tc, Bp, H), lambda c: (c, 0, 0)),
                pl.BlockSpec((Tc, Bp, H), lambda c: (C - 1 - c, 0, 0)),
            ],
            scratch_shapes=[pltpu.VMEM((Bp, 2 * H), jnp.float32),
                            pltpu.VMEM((Bp, H), jnp.float32),
                            pltpu.VMEM((Bp, H), jnp.float32)],
        ),
        compiler_params=pltpu.CompilerParams(
            dimension_semantics=("arbitrary",),   # sequential recurrence
            vmem_limit_bytes=vmem_limit),
    )(gx_f, gx_b, w_hh_blk)
    if Tp != T:
        h_f = h_f[:T]
        h_b = h_b[:T]
    return h_f, h_b


# -----------------------------------------------------------------------------
# Parameter preparation: gate permutation, direction fusion, bf16 cast
# -----------------------------------------------------------------------------
def _permute_gates(w):
    """Columns (i,f,g,o) -> (i,f,o,g) along the last (4H) axis."""
    i, f, g, o = jnp.split(w, 4, axis=-1)
    return jnp.concatenate([i, f, o, g], axis=-1)


def prepare_params(params, H):
    kp = {"lstm": []}
    for p in params["lstm"]:
        w_in = jnp.concatenate([_permute_gates(p["w_ih_f"]),
                                _permute_gates(p["w_ih_b"])], axis=1)     # (d_in, 8H)
        b = jnp.concatenate([_permute_gates(p["b_f"]),
                             _permute_gates(p["b_b"])], axis=1).astype(jnp.float32)
        w_blk = jnp.zeros((2 * H, 8 * H), jnp.float32)
        w_blk = w_blk.at[:H, :4 * H].set(_permute_gates(p["w_hh_f"]))
        w_blk = w_blk.at[H:, 4 * H:].set(_permute_gates(p["w_hh_b"]))
        lp = {
            "b": b,
            "w_hh_blk": w_blk.astype(jnp.bfloat16),
            "w_in": w_in.astype(jnp.bfloat16),
        }
        if w_in.shape[0] == 2 * H:            # hidden-to-hidden layers: row split
            lp["w_top"] = w_in[:H].astype(jnp.bfloat16)
            lp["w_bot"] = w_in[H:].astype(jnp.bfloat16)
        kp["lstm"].append(lp)
    kp["fc_w_top"] = params["fc_w"][:H].astype(jnp.bfloat16)
    kp["fc_w_bot"] = params["fc_w"][H:].astype(jnp.bfloat16)
    kp["fc_b"] = params["fc_b"].astype(jnp.float32)
    return kp


# -----------------------------------------------------------------------------
# Module wrapper (glue in plain JAX: transpose / reshape / pad only)
# -----------------------------------------------------------------------------
def bilstm_forward(x, params, layer_number, hidden_units, out_dim):
    """x: (B, T, input_size) -> (B, T, out_dim).  h0/c0 are zeros (as in module)."""
    B, T, D = x.shape
    H = hidden_units
    vmem_limit = _vmem_limit_bytes()
    budget = vmem_limit // 2                   # headroom for pipelining overhead

    # Pad batch to a multiple of 8 (sublane) for vreg/MXU occupancy; pad rows
    # are independent garbage and get sliced off at the end.
    Bp = ((B + 7) // 8) * 8
    if Bp != B:
        x = jnp.pad(x, ((0, Bp - B), (0, 0), (0, 0)))

    kp = prepare_params(params, H)
    xt = jnp.transpose(x, (1, 0, 2)).astype(jnp.bfloat16)   # (T, Bp, D) time-major
    N = T * Bp

    hf_flat = hb_flat = None
    for l in range(layer_number):
        lp = kp["lstm"][l]
        if l == 0:
            gf, gb = _row_tiled(
                _proj_in_kernel,
                [xt.reshape(N, D)],
                [lp["w_in"], lp["b"]],
                [(4 * H, jnp.bfloat16), (4 * H, jnp.bfloat16)],
                budget, vmem_limit)
        else:
            gf, gb = _row_tiled(
                _proj_hidden_kernel,
                [hf_flat, hb_flat],
                [lp["w_top"], lp["w_bot"], lp["b"]],
                [(4 * H, jnp.bfloat16), (4 * H, jnp.bfloat16)],
                budget, vmem_limit)
        gf = gf.reshape(T, Bp, 4 * H)
        gb = gb.reshape(T, Bp, 4 * H)
        h_f, h_b = bilstm_layer(gf, gb, lp["w_hh_blk"], budget, vmem_limit)
        hf_flat = h_f.reshape(N, H)
        hb_flat = h_b.reshape(N, H)

    (y,) = _row_tiled(
        _fc_sigmoid_kernel,
        [hf_flat, hb_flat],
        [kp["fc_w_top"], kp["fc_w_bot"], kp["fc_b"]],
        [(out_dim, jnp.float32)],
        budget, vmem_limit)
    y = y.reshape(T, Bp, out_dim)
    y = jnp.transpose(y, (1, 0, 2))[:B]        # only the small result is transposed
    return y


# -----------------------------------------------------------------------------
# Deterministic parameter init (PyTorch-style uniform(-1/sqrt(H), 1/sqrt(H)))
# -----------------------------------------------------------------------------
def init_params(key, input_size, layer_number, hidden_units, out_dim):
    H = hidden_units
    k = 1.0 / math.sqrt(H)
    params = {"lstm": []}
    for l in range(layer_number):
        d_in = input_size if l == 0 else 2 * H
        keys = jax.random.split(key, 9)
        key = keys[0]

        def u(kk, shape):
            return jax.random.uniform(kk, shape, jnp.float32, -k, k)

        params["lstm"].append({
            "w_ih_f": u(keys[1], (d_in, 4 * H)),
            "w_hh_f": u(keys[2], (H, 4 * H)),
            "b_f":    (u(keys[3], (1, 4 * H)) + u(keys[4], (1, 4 * H))),  # b_ih + b_hh
            "w_ih_b": u(keys[5], (d_in, 4 * H)),
            "w_hh_b": u(keys[6], (H, 4 * H)),
            "b_b":    (u(keys[7], (1, 4 * H)) + u(keys[8], (1, 4 * H))),
        })
    kf = 1.0 / math.sqrt(2 * H)
    k1, k2 = jax.random.split(key)
    params["fc_w"] = jax.random.uniform(k1, (2 * H, out_dim), jnp.float32, -kf, kf)
    params["fc_b"] = jax.random.uniform(k2, (1, out_dim), jnp.float32, -kf, kf)
    return params


# -----------------------------------------------------------------------------
# Pure-JAX f32 reference (PyTorch gate order; for correctness check only)
# -----------------------------------------------------------------------------
def _ref_lstm_dir(x_tbd, w_ih, w_hh, bias):
    T, B, _ = x_tbd.shape
    H = w_hh.shape[0]

    def step(carry, x_t):
        h, c = carry
        gates = x_t @ w_ih + h @ w_hh + bias[0]
        i = jax.nn.sigmoid(gates[:, :H])
        f = jax.nn.sigmoid(gates[:, H:2 * H])
        g = jnp.tanh(gates[:, 2 * H:3 * H])
        o = jax.nn.sigmoid(gates[:, 3 * H:])
        c = f * c + i * g
        h = o * jnp.tanh(c)
        return (h, c), h

    init = (jnp.zeros((B, H), jnp.float32), jnp.zeros((B, H), jnp.float32))
    _, hs = lax.scan(step, init, x_tbd)
    return hs


def _ref_forward(x, params, layer_number, hidden_units, out_dim):
    B, T, _ = x.shape
    layer_in = jnp.transpose(x, (1, 0, 2))
    for l in range(layer_number):
        p = params["lstm"][l]
        hf = _ref_lstm_dir(layer_in, p["w_ih_f"], p["w_hh_f"], p["b_f"])
        hb = _ref_lstm_dir(layer_in[::-1], p["w_ih_b"], p["w_hh_b"], p["b_b"])[::-1]
        layer_in = jnp.concatenate([hf, hb], axis=-1)
    out = jnp.transpose(layer_in, (1, 0, 2)).reshape(-1, 2 * hidden_units)
    y = jax.nn.sigmoid(out @ params["fc_w"] + params["fc_b"][0])
    return y.reshape(-1, T, out_dim)


# -----------------------------------------------------------------------------
if __name__ == "__main__":
    B, T = 2, 8
    input_size, layer_number, hidden_units, out_dim = 16, 2, 32, 4

    root = jax.random.PRNGKey(0)
    k_param, k_x = jax.random.split(root)
    params = init_params(k_param, input_size, layer_number, hidden_units, out_dim)
    x = jax.random.normal(k_x, (B, T, input_size), jnp.float32)

    out = bilstm_forward(x, params, layer_number, hidden_units, out_dim)
    out = jax.block_until_ready(out)

    ref = _ref_forward(x, params, layer_number, hidden_units, out_dim)
    assert out.shape == (B, T, out_dim), out.shape
    max_err = float(jnp.max(jnp.abs(out - ref)))
    # bf16 MXU operands / bf16 gx storage with f32 accumulation -> widened tol.
    assert jnp.allclose(out, ref, atol=3e-2, rtol=3e-2), f"mismatch, max_err={max_err}"

    print("KERNEL_OK")
</pallas_src>

<mosaic_0001>
module attributes {stable_mosaic.version = 11 : i64} {
  func.func @k(%arg0: i32, %arg1: memref<8x128xf32, #tpu.memory_space<vmem>>, %arg2: memref<8x128xf32, #tpu.memory_space<vmem>>) attributes {dimension_semantics = [#tpu.dimension_semantics<arbitrary>], iteration_bounds = array<i64: 2>, scalar_prefetch = 0 : i64, scratch_operands = 0 : i64, tpu.core_type = #tpu.core_type<tc>, window_params = [{pipeline_mode = #tpu.pipeline_mode<synchronous>, transform_indices = @transform_0, window_bounds = array<i64: 8, 128>}, {transform_indices = @transform_1, window_bounds = array<i64: 8, 128>}]} {
    %c0 = arith.constant 0 : index
    %c0_0 = arith.constant 0 : index
    %0 = vector.load %arg1[%c0, %c0_0] : memref<8x128xf32, #tpu.memory_space<vmem>>, vector<8x128xf32>
    %cst = arith.constant 1.000000e+00 : f32
    %1 = vector.broadcast %cst : f32 to vector<8x128xf32>
    %2 = arith.addf %0, %1 : vector<8x128xf32>
    %c0_1 = arith.constant 0 : index
    %c0_2 = arith.constant 0 : index
    %3 = vector.load %arg2[%c0_1, %c0_2] : memref<8x128xf32, #tpu.memory_space<vmem>>, vector<8x128xf32>
    tpu.vector_store %arg2[%c0_1, %c0_2], %2 {strides = array<i32>} : memref<8x128xf32, #tpu.memory_space<vmem>>, vector<8x128xf32>,
    return
  }
  func.func @transform_0(%arg0: i32) -> (i32, i32) {
    %c0_i32 = arith.constant 0 : i32
    %c0_i32_0 = arith.constant 0 : i32
    %c0_i32_1 = arith.constant 0 : i32
    return %c0_i32, %c0_i32_0 : i32, i32
  }
  func.func @transform_1(%arg0: i32) -> (i32, i32) {
    %c0_i32 = arith.constant 0 : i32
    %c0_i32_0 = arith.constant 0 : i32
    return %arg0, %c0_i32 : i32, i32
  }
}

module attributes {stable_mosaic.version = 11 : i64} {
  func.func @_proj_in_kernel(%arg0: i32, %arg1: memref<64x16xbf16, #tpu.memory_space<vmem>>, %arg2: memref<16x256xbf16, #tpu.memory_space<vmem>>, %arg3: memref<1x256xf32, #tpu.memory_space<vmem>>, %arg4: memref<64x128xbf16, #tpu.memory_space<vmem>>, %arg5: memref<64x128xbf16, #tpu.memory_space<vmem>>) attributes {dimension_semantics = [#tpu.dimension_semantics<parallel>], iteration_bounds = array<i64: 1>, scalar_prefetch = 0 : i64, scratch_operands = 0 : i64, tpu.core_type = #tpu.core_type<tc>, window_params = [{transform_indices = @transform_0, window_bounds = array<i64: 64, 16>}, {pipeline_mode = #tpu.pipeline_mode<synchronous>, transform_indices = @transform_1, window_bounds = array<i64: 16, 256>}, {pipeline_mode = #tpu.pipeline_mode<synchronous>, transform_indices = @transform_2, window_bounds = array<i64: 1, 256>}, {transform_indices = @transform_3, window_bounds = array<i64: 64, 128>}, {transform_indices = @transform_4, window_bounds = array<i64: 64, 128>}]} {
    %c0 = arith.constant 0 : index
    %c0_0 = arith.constant 0 : index
    %0 = vector.load %arg1[%c0, %c0_0] : memref<64x16xbf16, #tpu.memory_space<vmem>>, vector<64x16xbf16>
    %c0_1 = arith.constant 0 : index
    %c0_2 = arith.constant 0 : index
    %1 = vector.load %arg2[%c0_1, %c0_2] : memref<16x256xbf16, #tpu.memory_space<vmem>>, vector<16x256xbf16>
    %cst = arith.constant dense<0.000000e+00> : vector<64x256xf32>
    %2 = tpu.matmul %0, %1, %cst {dimension_numbers = #tpu.dot_dimension_numbers<[1], [0], [0], [1], [0, 0, 1, 1], [], []>} : vector<64x16xbf16>, vector<16x256xbf16>, vector<64x256xf32> -> vector<64x256xf32>
    %c0_3 = arith.constant 0 : index
    %c0_4 = arith.constant 0 : index
    %3 = vector.load %arg3[%c0_3, %c0_4] : memref<1x256xf32, #tpu.memory_space<vmem>>, vector<1x256xf32>
    %4 = vector.broadcast %3 : vector<1x256xf32> to vector<64x256xf32>
    %5 = arith.addf %2, %4 : vector<64x256xf32>
    %6 = vector.extract_strided_slice %5 {offsets = [0, 0], sizes = [64, 128], strides = [1, 1]} : vector<64x256xf32> to vector<64x128xf32>
    %7 = arith.truncf %6 : vector<64x128xf32> to vector<64x128xbf16>
    %c0_5 = arith.constant 0 : index
    %c0_6 = arith.constant 0 : index
    %8 = vector.load %arg4[%c0_5, %c0_6] : memref<64x128xbf16, #tpu.memory_space<vmem>>, vector<64x128xbf16>
    tpu.vector_store %arg4[%c0_5, %c0_6], %7 {strides = array<i32>} : memref<64x128xbf16, #tpu.memory_space<vmem>>, vector<64x128xbf16>,
    %9 = vector.extract_strided_slice %5 {offsets = [0, 128], sizes = [64, 128], strides = [1, 1]} : vector<64x256xf32> to vector<64x128xf32>
    %10 = arith.truncf %9 : vector<64x128xf32> to vector<64x128xbf16>
    %c0_7 = arith.constant 0 : index
    %c0_8 = arith.constant 0 : index
    %11 = vector.load %arg5[%c0_7, %c0_8] : memref<64x128xbf16, #tpu.memory_space<vmem>>, vector<64x128xbf16>
    tpu.vector_store %arg5[%c0_7, %c0_8], %10 {strides = array<i32>} : memref<64x128xbf16, #tpu.memory_space<vmem>>, vector<64x128xbf16>,
    return
  }
  func.func @transform_0(%arg0: i32) -> (i32, i32) {
    %c0_i32 = arith.constant 0 : i32
    %c0_i32_0 = arith.constant 0 : i32
    return %arg0, %c0_i32 : i32, i32
  }
  func.func @transform_1(%arg0: i32) -> (i32, i32) {
    %c0_i32 = arith.constant 0 : i32
    %c0_i32_0 = arith.constant 0 : i32
    %c0_i32_1 = arith.constant 0 : i32
    return %c0_i32, %c0_i32_0 : i32, i32
  }
  func.func @transform_2(%arg0: i32) -> (i32, i32) {
    %c0_i32 = arith.constant 0 : i32
    %c0_i32_0 = arith.constant 0 : i32
    %c0_i32_1 = arith.constant 0 : i32
    return %c0_i32, %c0_i32_0 : i32, i32
  }
  func.func @transform_3(%arg0: i32) -> (i32, i32) {
    %c0_i32 = arith.constant 0 : i32
    %c0_i32_0 = arith.constant 0 : i32
    return %arg0, %c0_i32 : i32, i32
  }
  func.func @transform_4(%arg0: i32) -> (i32, i32) {
    %c0_i32 = arith.constant 0 : i32
    %c0_i32_0 = arith.constant 0 : i32
    return %arg0, %c0_i32 : i32, i32
  }
}

</mosaic_0001>

<llo_original>
// kernel: tpu_custom_call.1
$region0: #{tpu_custom_call.1}
  #allocation0 [shape = 'u32[]', space=smem, size = 0x4, offset = 0x4, fixed_abs, tag = 'smem constant byte address 0x4 - core index']
  #allocation1 [shape = 'u32[144,128]{1,0:T(1,128)}', space=vmem, size = 0x12000, scoped, tag = 'internal scratch']
  %s0 = inlined_call_operand.hbm [shape: f32[8,128], index: 0, kind: input, shape index: {}]
  %s1 = inlined_call_operand.hbm [shape: f32[16,128], index: 1, kind: output, shape index: {}]
  %s2 = sld [smem:[#allocation0]]
  $region41: #{tpu_custom_call.1} parent=0
    _
  %s4 = ssub.s32 1, %s2
  %s5 = scalar_select 0, %s4, %s2
  $region1: #{tpu_custom_call.1} parent=0
    #allocation2 [shape = 'u8[4096]{0}', space=vmem, size = 0x1000, scoped, tag = 'input window, operand 0, single buffered']
    #allocation3 [shape = 's32[2]{0}', space=sflag, size = 0x8, scoped, tag = 'scoped memory for tpu_custom_call.1']
    #allocation4 [shape = 's32[2]{0}', space=sflag, size = 0x8, scoped, tag = 'scoped memory for tpu_custom_call.1']
    #allocation5 [shape = 'u8[8192]{0}', space=vmem, size = 0x2000, scoped, tag = 'output window, operand 0']
    %6 = vsyncpa [#allocation3], 0
    %7 = vsyncpa [#allocation4], 0
    %s8 = scalar_lea.sflag [#allocation4], 1
    %9 = vsyncpa %s8, 0
    loop: start=0, step=1, limit=4
    $region2: #{tpu_custom_call.1} parent=1 // loop_pre_header
      _
    $region3: #{tpu_custom_call.1} parent=1 // loop_header
      %s11 = sphi 0, %s15
      %p12 = scmp.ge.s32.totalorder %s11, 4
      %s19 = sphi 0, %s19
      %s21 = sphi 0, %s19
      %s22 = sphi 0, %s21
      %s36 = sphi 0, %s22
      %s42 = sphi 0, %s44
      %s45 = sphi 0, %s42
      %s46 = sphi 0, %s45
      %s62 = sphi 0, %s46
    $region4: #{tpu_custom_call.1} parent=1 // loop_header_branch
      %14 = sbr.rel (%p12) target = $region8
    $region5: #{tpu_custom_call.1} parent=1 // loop_body
      %s16 = ssub.s32 %s11, 1
      %s17 = ssub.s32 %s11, 2
      %s18 = sadd.s32 %s11, 1
      %s20 = sadd.s32 %s19, 1
      %p23 = scmp.eq.s32.totalorder %s11, 1
      %p24 = scmp.ne.s32.totalorder %s19, %s21
      %p25 = scmp.eq.s32.totalorder %s11, 0
      %p26 = por %p24, %p25
      %p27 = scmp.ne.s32.totalorder %s19, %s21
      %p28 = scmp.eq.s32.totalorder %s16, 1
      %p29 = por %p27, %p28
      %p30 = scmp.ne.s32.totalorder %s21, %s22
      %p31 = scmp.eq.s32.totalorder %s16, 0
      %p32 = por %p30, %p31
      %p33 = scmp.ne.s32.totalorder %s21, %s22
      %p34 = scmp.eq.s32.totalorder %s17, 1
      %p35 = por %p33, %p34
      %p37 = scmp.ne.s32.totalorder %s22, %s36
      %p38 = scmp.eq.s32.totalorder %s17, 0
      %p39 = por %p37, %p38
      %s40 = ssub.s32 %s11, %s18
      %p41 = scmp.eq.s32.totalorder %s40, 0
      %s43 = sadd.s32 %s42, 1
      %s44 = scalar_select %p41, %s42, %s43
      %p47 = pneg %p41
      %p48 = scmp.eq.s32.totalorder %s11, 1
      %p49 = por %p47, %p48
      %p50 = scmp.ne.s32.totalorder %s42, %s45
      %p51 = scmp.eq.s32.totalorder %s11, 0
      %p52 = por %p50, %p51
      %p53 = scmp.ne.s32.totalorder %s42, %s45
      %p54 = scmp.eq.s32.totalorder %s16, 1
      %p55 = por %p53, %p54
      %p56 = scmp.ne.s32.totalorder %s45, %s46
      %p57 = scmp.eq.s32.totalorder %s16, 0
      %p58 = por %p56, %p57
      %p59 = scmp.ne.s32.totalorder %s45, %s46
      %p60 = scmp.eq.s32.totalorder %s17, 1
      %p61 = por %p59, %p60
      %p63 = scmp.ne.s32.totalorder %s46, %s62
      %p64 = scmp.eq.s32.totalorder %s17, 0
      %p65 = por %p63, %p64
      %p66 = scmp.le.s32.totalorder 1, %s11
      %p67 = scmp.lt.s32.totalorder %s11, 3
      %p68 = pnand %p66, %p67
      %p69 = pneg %p68
      // Predicated region
      $region9: #{tpu_custom_call.1} parent=5 // pred_check
        _
      $region10: #{tpu_custom_call.1} parent=5 // pred_check_branch
        %71 = sbr.rel (%p68) target = $region12
      $region11: #{tpu_custom_call.1} parent=5 // pred_region
        %s72 = ssub.s32 %s11, 1
        // Predicated region
        $region13: #{tpu_custom_call.1} parent=11 // pred_check
          %p73 = pneg %p32
        $region14: #{tpu_custom_call.1} parent=11 // pred_check_branch
          %75 = sbr.rel (%p73) target = $region16
        $region15: #{tpu_custom_call.1} parent=11 // pred_region
          %s77 = ssub.s32 128, 128
          %78 = vsyncadd [#allocation3], %s77
          %s80 = sshll.u32 [#allocation2], 4
          %s81 = int_to_ptr.vmem [resolvable:$true] %s80
          %83 = dma.hbm_to_vmem [thread:$0]  %s0, 128, %s81, [#allocation3]
        $region16: #{tpu_custom_call.1} parent=11 // pred_fallthru
          _
      $region12: #{tpu_custom_call.1} parent=5 // pred_fallthru
        _
      %p84 = scmp.lt.s32.totalorder %s11, 2
      // Predicated region
      $region17: #{tpu_custom_call.1} parent=5 // pred_check
        %p85 = pneg %p84
      $region18: #{tpu_custom_call.1} parent=5 // pred_check_branch
        %87 = sbr.rel (%p85) target = $region20
      $region19: #{tpu_custom_call.1} parent=5 // pred_region
        _
      $region20: #{tpu_custom_call.1} parent=5 // pred_fallthru
        _
      %p88 = scmp.le.s32.totalorder 1, %s11
      %p89 = scmp.lt.s32.totalorder %s11, 3
      %p90 = pnand %p88, %p89
      %p91 = pneg %p90
      // Predicated region
      $region21: #{tpu_custom_call.1} parent=5 // pred_check
        _
      $region22: #{tpu_custom_call.1} parent=5 // pred_check_branch
        %93 = sbr.rel (%p90) target = $region24
      $region23: #{tpu_custom_call.1} parent=5 // pred_region
        %s94 = ssub.s32 %s11, 1
        // Predicated region
        $region25: #{tpu_custom_call.1} parent=23 // pred_check
          %p95 = pneg %p32
        $region26: #{tpu_custom_call.1} parent=23 // pred_check_branch
          %97 = sbr.rel (%p95) target = $region28
        $region27: #{tpu_custom_call.1} parent=23 // pred_region
          %98 = dma.done [#allocation3], 128
        $region28: #{tpu_custom_call.1} parent=23 // pred_fallthru
          _
        %p99 = pneg %p32
        %p100 = pneg %p29
        %p101 = pneg %p58
        %p102 = pneg %p55
        %s103 = sand.u32 %s45, 1
        %s104 = scalar_lea.sflag [#allocation4], %s103
        %s105 = sand.u32 %s45, 1
        %s106 = smul.addr %s105, 8
        %s107 = scalar_lea.vmem [#allocation5], %s106
        %v108 = vld [vmem:[#allocation2] sm:$0xff]
        %v109 = vadd.f32 %v108, 1.0
        %110 = vst [vmem:[%s107] sm:$0xff] %v109
        %s111 = sand.u32 %s45, 1
        %s112 = scalar_lea.sflag [#allocation4], %s111
        %s113 = sand.u32 %s45, 1
        %s114 = smul.addr %s113, 8
        %s115 = scalar_lea.vmem [#allocation5], %s114
        // Predicated region
        $region29: #{tpu_custom_call.1} parent=23 // pred_check
          %p116 = pneg %p55
        $region30: #{tpu_custom_call.1} parent=23 // pred_check_branch
          %118 = sbr.rel (%p116) target = $region32
        $region31: #{tpu_custom_call.1} parent=23 // pred_region
          %s120 = ssub.s32 128, 128
          %121 = vsyncadd %s112, %s120
          %s122 = smul.addr %s16, 128
          %s123 = scalar_lea.hbm %s1, %s122
          %s125 = sshll.u32 %s115, 4
          %s126 = int_to_ptr.vmem [resolvable:$true] %s125
          %128 = dma.vmem_to_hbm [thread:$0]  %s126, 128, %s123, %s112
        $region32: #{tpu_custom_call.1} parent=23 // pred_fallthru
          _
      $region24: #{tpu_custom_call.1} parent=5 // pred_fallthru
        _
      %p129 = scmp.le.s32.totalorder 2, %s11
      // Predicated region
      $region33: #{tpu_custom_call.1} parent=5 // pred_check
        %p130 = pneg %p129
      $region34: #{tpu_custom_call.1} parent=5 // pred_check_branch
        %132 = sbr.rel (%p130) target = $region36
      $region35: #{tpu_custom_call.1} parent=5 // pred_region
        %s133 = ssub.s32 %s11, 2
        // Predicated region
        $region37: #{tpu_custom_call.1} parent=35 // pred_check
          %p134 = pneg %p61
        $region38: #{tpu_custom_call.1} parent=35 // pred_check_branch
          %136 = sbr.rel (%p134) target = $region40
        $region39: #{tpu_custom_call.1} parent=35 // pred_region
          %s137 = sand.u32 %s46, 1
          %s138 = scalar_lea.sflag [#allocation4], %s137
          %s139 = sand.u32 %s46, 1
          %s140 = smul.addr %s139, 8
          %s141 = scalar_lea.vmem [#allocation5], %s140
          %142 = dma.done %s138, 128
        $region40: #{tpu_custom_call.1} parent=35 // pred_fallthru
          _
      $region36: #{tpu_custom_call.1} parent=5 // pred_fallthru
        _
    $region6: #{tpu_custom_call.1} parent=1 // loop_footer
      %s15 = sadd.s32 1, %s11
    $region7: #{tpu_custom_call.1} parent=1 // loop_footer_branch
      %10 = sbr.rel target = $region3
    $region8: #{tpu_custom_call.1} parent=1 // loop_exit
      _
    %143 = vsyncpa [#allocation3], 1
    %s144 = scalar_lea.sflag [#allocation3], 1
    %145 = vsyncpa %s144, 1
    %146 = vsyncpa [#allocation4], 1
    %s147 = scalar_lea.sflag [#allocation4], 1
    %148 = vsyncpa %s147, 1

// kernel: tpu_custom_call.1
$region0: #{tpu_custom_call.1}
  #allocation0 [shape = 'u32[]', space=smem, size = 0x4, offset = 0x4, fixed_abs, tag = 'smem constant byte address 0x4 - core index']
  #allocation1 [shape = 'u32[144,128]{1,0:T(1,128)}', space=vmem, size = 0x12000, scoped, tag = 'internal scratch']
  %s0 = inlined_call_operand.vmem [shape: bf16[64,16], index: 0, kind: input, shape index: {}]
  %s1 = inlined_call_operand.vmem [shape: bf16[16,256], index: 1, kind: input, shape index: {}]
  %s2 = inlined_call_operand.vmem [shape: f32[1,256], index: 2, kind: input, shape index: {}]
  %s3 = inlined_call_operand.hbm [shape: bf16[64,128], index: 3, kind: output, shape index: {0}]
  %s4 = inlined_call_operand.hbm [shape: bf16[64,128], index: 4, kind: output, shape index: {1}]
  %5 = xla_tuple %s3, %s4
  %s6 = sld [smem:[#allocation0]]
  $region30: #{tpu_custom_call.1} parent=0
    _
  %s8 = ssub.s32 1, %s6
  %s9 = scalar_select 0, %s8, %s6
  $region1: #{tpu_custom_call.1} parent=0
    #allocation2 [shape = 'u8[16384]{0}', space=vmem, size = 0x4000, scoped, tag = 'output window, operand 0, single buffered']
    #allocation3 [shape = 's32[1]{0}', space=sflag, size = 0x4, scoped, tag = 'scoped memory for tpu_custom_call.1']
    #allocation4 [shape = 'u8[16384]{0}', space=vmem, size = 0x4000, scoped, tag = 'output window, operand 1, single buffered']
    #allocation5 [shape = 's32[1]{0}', space=sflag, size = 0x4, scoped, tag = 'scoped memory for tpu_custom_call.1']
    %10 = vsyncpa [#allocation3], 0
    %11 = vsyncpa [#allocation5], 0
    // Predicated region
    $region2: #{tpu_custom_call.1} parent=1 // pred_check
      _
    $region3: #{tpu_custom_call.1} parent=1 // pred_check_branch
      %13 = sbr.rel (0) target = $region5
    $region4: #{tpu_custom_call.1} parent=1 // pred_region
      _
    $region5: #{tpu_custom_call.1} parent=1 // pred_fallthru
      _
    // Predicated region
    $region6: #{tpu_custom_call.1} parent=1 // pred_check
      _
    $region7: #{tpu_custom_call.1} parent=1 // pred_check_branch
      %15 = sbr.rel (0) target = $region9
    $region8: #{tpu_custom_call.1} parent=1 // pred_region
      _
    $region9: #{tpu_custom_call.1} parent=1 // pred_fallthru
      _
    // Predicated region
    $region10: #{tpu_custom_call.1} parent=1 // pred_check
      _
    $region11: #{tpu_custom_call.1} parent=1 // pred_check_branch
      %17 = sbr.rel (0) target = $region13
    $region12: #{tpu_custom_call.1} parent=1 // pred_region
      _
    $region13: #{tpu_custom_call.1} parent=1 // pred_fallthru
      _
    %v19 = vld [vmem:[%s0] sm:$0xf]
    %v20 = vld [vmem:[%s0 + $0x4] sm:$0xf]
    %v21 = vld [vmem:[%s0 + $0x8] sm:$0xf]
    %v22 = vld [vmem:[%s0 + $0xc] sm:$0xf]
    %v23 = vld [vmem:[%s0 + $0x10] sm:$0xf]
    %v24 = vld [vmem:[%s0 + $0x14] sm:$0xf]
    %v25 = vld [vmem:[%s0 + $0x18] sm:$0xf]
    %v26 = vld [vmem:[%s0 + $0x1c] sm:$0xf]
    %v27 = vld [vmem:[%s1] sm:$0xff]
    %v28 = vld [vmem:[%s1 + $0x8] sm:$0xff]
    %v29 = vld [vmem:[%s2] sm:$0x3]
    %v31 = vlaneseq
    %v32 = vshrl.u32 %v31, 7
    %v33 = vsub.s32 0, %v32
    %v34 = vrot.slane %v29, %v33
    %v35 = vlaneseq
    %v36 = vshrl.u32 %v35, 7
    %v37 = vsub.s32 1, %v36
    %v38 = vrot.slane %v29, %v37
    %v49 = vunpack.c.l.b16 %v19
    %v50 = vunpack.c.l.b16 %v20
    %v51 = vunpack.c.l.b16 %v21
    %v52 = vunpack.c.l.b16 %v22
    %v53 = vunpack.c.l.b16 %v23
    %v54 = vunpack.c.l.b16 %v24
    %v55 = vunpack.c.l.b16 %v25
    %v56 = vunpack.c.l.b16 %v26
    %v57 = vpack.c.b16 %v50, %v49
    %v58 = vpack.c.b16 %v52, %v51
    %v59 = vpack.c.b16 %v54, %v53
    %v60 = vpack.c.b16 %v56, %v55
    %v63 = vunpack.c.l.b16 %v27
    %v64 = vunpack.c.h.b16 %v27
    %v65 = vunpack.c.l.b16 %v28
    %v66 = vunpack.c.h.b16 %v28
    %v67 = vpack.c.b16 %v65, %v63
    %v68 = vpack.c.b16 %v66, %v64
    %vm71 = vcmask 130048
    %v73 = vsel %vm71, %v57, 0
    %v76 = vsel %vm71, %v58, 0
    %v79 = vsel %vm71, %v59, 0
    %v82 = vsel %vm71, %v60, 0
    %84 = vmatprep.subr.bf16.mxu0 0
    %85 = vmatpush1.bf16.msra.mxu0 0
    %86 = vmatprep.subr.bf16.mxu0 0
    %87 = vmatpush1.bf16.msra.mxu0 0
    %88 = vmatprep.subr.bf16.mxu0 0
    %89 = vmatpush1.bf16.msra.mxu0 0
    %90 = vmatprep.subr.bf16.mxu0 0
    %91 = vmatpush1.bf16.msra.mxu0 0
    %92 = vmatprep.subr.bf16.mxu0 0
    %93 = vmatpush1.bf16.msra.mxu0 0
    %94 = vmatprep.subr.bf16.mxu0 0
    %95 = vmatpush1.bf16.msra.mxu0 0
    %96 = vmatprep.subr.bf16.mxu0 0
    %97 = vmatpush1.bf16.msra.mxu0 0
    %98 = vmatprep.subr.bf16.mxu0 %v68
    %99 = vmatpush1.bf16.msra.mxu0 %v67
    %100 = vmatprep.subr.bf16.mxu0 0
    %101 = vmatpush2.bf16.msra.mxu0 0
    %102 = vmatprep.subr.bf16.mxu0 0
    %103 = vmatpush2.bf16.msra.mxu0 0
    %104 = vmatprep.subr.bf16.mxu0 0
    %105 = vmatpush2.bf16.msra.mxu0 0
    %106 = vmatprep.subr.bf16.mxu0 0
    %107 = vmatpush2.bf16.msra.mxu0 0
    %108 = vmatprep.subr.bf16.mxu0 0
    %109 = vmatpush2.bf16.msra.mxu0 0
    %110 = vmatprep.subr.bf16.mxu0 0
    %111 = vmatpush2.bf16.msra.mxu0 0
    %112 = vmatprep.subr.bf16.mxu0 0
    %113 = vmatpush2.bf16.msra.mxu0 0
    %114 = vmatprep.subr.bf16.mxu0 0
    %115 = vmatpush2.bf16.msra.mxu0 0
    %116 = vmatprep.mubr.bf16.mxu0 0
    %117 = vmatmul.mubr.bf16.gmra.mxu0 %v73
    %v118 = vpop.f32.mrf.mxu0
    %v119 = vadd.f32 %v34, %v118
    %v120 = vpop.f32.mrf.mxu0
    %v121 = vadd.f32 %v38, %v120
    %v122 = vpop.f32.mrf.mxu0
    %v123 = vadd.f32 %v34, %v122
    %v124 = vpop.f32.mrf.mxu0
    %v125 = vadd.f32 %v38, %v124
    %126 = vmatprep.mubr.bf16.mxu0 0
    %127 = vmatmul.mubr.bf16.gmra.mxu0 %v76
    %v128 = vpop.f32.mrf.mxu0
    %v129 = vadd.f32 %v34, %v128
    %v130 = vpop.f32.mrf.mxu0
    %v131 = vadd.f32 %v38, %v130
    %v132 = vpop.f32.mrf.mxu0
    %v133 = vadd.f32 %v34, %v132
    %v134 = vpop.f32.mrf.mxu0
    %v135 = vadd.f32 %v38, %v134
    %136 = vmatprep.mubr.bf16.mxu0 0
    %137 = vmatmul.mubr.bf16.gmra.mxu0 %v79
    %v138 = vpop.f32.mrf.mxu0
    %v139 = vadd.f32 %v34, %v138
    %v140 = vpop.f32.mrf.mxu0
    %v141 = vadd.f32 %v38, %v140
    %v142 = vpop.f32.mrf.mxu0
    %v143 = vadd.f32 %v34, %v142
    %v144 = vpop.f32.mrf.mxu0
    %v145 = vadd.f32 %v38, %v144
    %146 = vmatprep.mubr.bf16.mxu0 0
    %147 = vmatmul.mubr.bf16.gmra.mxu0 %v82
    %v148 = vpop.f32.mrf.mxu0
    %v149 = vadd.f32 %v34, %v148
    %v150 = vpop.f32.mrf.mxu0
    %v151 = vadd.f32 %v38, %v150
    %v152 = vpop.f32.mrf.mxu0
    %v153 = vadd.f32 %v34, %v152
    %v154 = vpop.f32.mrf.mxu0
    %v155 = vadd.f32 %v38, %v154
    %156 = vdwg.mxu0
    %v157 = vpack.c.bf16 %v123, %v119
    %v158 = vpack.c.bf16 %v133, %v129
    %v159 = vpack.c.bf16 %v143, %v139
    %v160 = vpack.c.bf16 %v153, %v149
    %v165 = vunpack.c.l.b16 %v157
    %v166 = vunpack.c.h.b16 %v157
    %v167 = vunpack.c.l.b16 %v158
    %v168 = vunpack.c.h.b16 %v158
    %v169 = vunpack.c.l.b16 %v159
    %v170 = vunpack.c.h.b16 %v159
    %v171 = vunpack.c.l.b16 %v160
    %v172 = vunpack.c.h.b16 %v160
    %v173 = vpack.c.b16 %v165, %v165
    %v174 = vpack.c.b16 %v166, %v166
    %v175 = vpack.c.b16 %v167, %v167
    %v176 = vpack.c.b16 %v168, %v168
    %v177 = vpack.c.b16 %v169, %v169
    %v178 = vpack.c.b16 %v170, %v170
    %v179 = vpack.c.b16 %v171, %v171
    %v180 = vpack.c.b16 %v172, %v172
    %189 = vst [vmem:[#allocation2] sm:$0xf] %v173
    %190 = vst [vmem:[#allocation2 + $0x4] sm:$0xf] %v174
    %191 = vst [vmem:[#allocation2 + $0x8] sm:$0xf] %v175
    %192 = vst [vmem:[#allocation2 + $0xc] sm:$0xf] %v176
    %193 = vst [vmem:[#allocation2 + $0x10] sm:$0xf] %v177
    %194 = vst [vmem:[#allocation2 + $0x14] sm:$0xf] %v178
    %195 = vst [vmem:[#allocation2 + $0x18] sm:$0xf] %v179
    %196 = vst [vmem:[#allocation2 + $0x1c] sm:$0xf] %v180
    %v197 = vpack.c.bf16 %v125, %v121
    %v198 = vpack.c.bf16 %v135, %v131
    %v199 = vpack.c.bf16 %v145, %v141
    %v200 = vpack.c.bf16 %v155, %v151
    %v205 = vunpack.c.l.b16 %v197
    %v206 = vunpack.c.h.b16 %v197
    %v207 = vunpack.c.l.b16 %v198
    %v208 = vunpack.c.h.b16 %v198
    %v209 = vunpack.c.l.b16 %v199
    %v210 = vunpack.c.h.b16 %v199
    %v211 = vunpack.c.l.b16 %v200
    %v212 = vunpack.c.h.b16 %v200
    %v213 = vpack.c.b16 %v205, %v205
    %v214 = vpack.c.b16 %v206, %v206
    %v215 = vpack.c.b16 %v207, %v207
    %v216 = vpack.c.b16 %v208, %v208
    %v217 = vpack.c.b16 %v209, %v209
    %v218 = vpack.c.b16 %v210, %v210
    %v219 = vpack.c.b16 %v211, %v211
    %v220 = vpack.c.b16 %v212, %v212
    %229 = vst [vmem:[#allocation4] sm:$0xf] %v213
    %230 = vst [vmem:[#allocation4 + $0x4] sm:$0xf] %v214
    %231 = vst [vmem:[#allocation4 + $0x8] sm:$0xf] %v215
    %232 = vst [vmem:[#allocation4 + $0xc] sm:$0xf] %v216
    %233 = vst [vmem:[#allocation4 + $0x10] sm:$0xf] %v217
    %234 = vst [vmem:[#allocation4 + $0x14] sm:$0xf] %v218
    %235 = vst [vmem:[#allocation4 + $0x18] sm:$0xf] %v219
    %236 = vst [vmem:[#allocation4 + $0x1c] sm:$0xf] %v220
    // Predicated region
    $region14: #{tpu_custom_call.1} parent=1 // pred_check
      _
    $region15: #{tpu_custom_call.1} parent=1 // pred_check_branch
      %238 = sbr.rel (0) target = $region17
    $region16: #{tpu_custom_call.1} parent=1 // pred_region
      %s240 = ssub.s32 512, 512
      %241 = vsyncadd [#allocation3], %s240
      %s242 = sshll.u32 [#allocation2], 4
      %s243 = int_to_ptr.vmem [resolvable:$true] %s242
      %248 = dma.vmem_to_hbm [thread:$0]  %s243, 512, %s3, [#allocation3], 64, 64, 4
    $region17: #{tpu_custom_call.1} parent=1 // pred_fallthru
      _
    // Predicated region
    $region18: #{tpu_custom_call.1} parent=1 // pred_check
      _
    $region19: #{tpu_custom_call.1} parent=1 // pred_check_branch
      %250 = sbr.rel (0) target = $region21
    $region20: #{tpu_custom_call.1} parent=1 // pred_region
      %s252 = ssub.s32 512, 512
      %253 = vsyncadd [#allocation5], %s252
      %s254 = sshll.u32 [#allocation4], 4
      %s255 = int_to_ptr.vmem [resolvable:$true] %s254
      %260 = dma.vmem_to_hbm [thread:$0]  %s255, 512, %s4, [#allocation5], 64, 64, 4
    $region21: #{tpu_custom_call.1} parent=1 // pred_fallthru
      _
    // Predicated region
    $region22: #{tpu_custom_call.1} parent=1 // pred_check
      _
    $region23: #{tpu_custom_call.1} parent=1 // pred_check_branch
      %262 = sbr.rel (0) target = $region25
    $region24: #{tpu_custom_call.1} parent=1 // pred_region
      %263 = dma.done [#allocation3], 512
    $region25: #{tpu_custom_call.1} parent=1 // pred_fallthru
      _
    // Predicated region
    $region26: #{tpu_custom_call.1} parent=1 // pred_check
      _
    $region27: #{tpu_custom_call.1} parent=1 // pred_check_branch
      %265 = sbr.rel (0) target = $region29
    $region28: #{tpu_custom_call.1} parent=1 // pred_region
      %266 = dma.done [#allocation5], 512
    $region29: #{tpu_custom_call.1} parent=1 // pred_fallthru
      _
    %267 = vsyncpa [#allocation3], 1
    %268 = vsyncpa [#allocation5], 1

</llo_original>
